<compile_context>
chip_gen: v5e
topology: v5e:2x2
jax: 0.10.0
libtpu: 0.0.40
codegen_flags: <defaults>
</compile_context>

<pallas_src>
import functools

import numpy as np
import jax
import jax.numpy as jnp
from jax import lax
from jax.experimental import pallas as pl
from jax.experimental.pallas import tpu as pltpu


# ----------------------------- helpers --------------------------------------

def _pick_tile(n, cap):
    """Largest tile t <= cap with n % t == 0, preferring 256/128/8 alignment.

    Always returns either an 8-aligned divisor of n or n itself (a full-dim
    block is always a legal BlockSpec), so no ragged padding is ever needed."""
    cap = max(8, min(cap, n))
    for align in (256, 128, 8):
        t = (cap // align) * align
        while t >= align:
            if n % t == 0:
                return t
            t -= align
    return n


def _shift_bases(H, W):
    """0/1 shift bases for the 7x7 'same' conv, precomputed host-side.

    R[d]  (H,H): (R[d] @ B)[y, x]  = B[y + dy, x]   (zero outside), dy = d - 3
    Cb[d] (W,W): (A @ Cb[d])[y, x] = A[y, x + dx]   (zero outside), dx = d - 3
    """
    R = np.zeros((7, H, H), np.float32)
    Cb = np.zeros((7, W, W), np.float32)
    for i, d in enumerate(range(-3, 4)):
        for y in range(H):
            if 0 <= y + d < H:
                R[i, y, y + d] = 1.0
        for x in range(W):
            if 0 <= x + d < W:
                Cb[i, x + d, x] = 1.0
    return R, Cb


# ----------------------------- Pallas kernels ------------------------------

def _pw_conv_bn_kernel(x_ref, w_ref, shift_ref, o_ref, *, relu):
    """1x1 conv (matmul over channels); BN scale pre-folded into w, +shift."""
    y = jnp.dot(x_ref[...], w_ref[...], preferred_element_type=jnp.float32)
    y = y + shift_ref[...]
    if relu:
        y = jnp.maximum(y, 0.0)
    o_ref[...] = y.astype(o_ref.dtype)


def pointwise_conv_bn(x2d, w_scaled, shift, *, relu, out_dtype, tm_cap=1024):
    """conv1: tiled over M rows, auto-pipelined, 'parallel' for megacore."""
    M, cin = x2d.shape
    cout = w_scaled.shape[1]
    tm = _pick_tile(M, tm_cap)
    return pl.pallas_call(
        functools.partial(_pw_conv_bn_kernel, relu=relu),
        out_shape=jax.ShapeDtypeStruct((M, cout), out_dtype),
        grid=(M // tm,),
        in_specs=[
            pl.BlockSpec((tm, cin), lambda i: (i, 0)),
            pl.BlockSpec((cin, cout), lambda i: (0, 0)),
            pl.BlockSpec((1, cout), lambda i: (0, 0)),
        ],
        out_specs=pl.BlockSpec((tm, cout), lambda i: (i, 0)),
        compiler_params=pltpu.CompilerParams(
            dimension_semantics=("parallel",),
            vmem_limit_bytes=64 * 1024 * 1024),
    )(x2d, w_scaled, shift)


def _gconv3x3_bn_relu_kernel(xflat_ref, w_ref, shift_ref, o_ref, *, H, W, Wp2):
    """3x3 grouped conv on a flattened per-image halo block + BN shift + ReLU.

    xflat_ref : (1, (H+3)*(W+2), C) zero-padded image, flattened so every
                filter tap is one contiguous row-offset slice (no im2col and no
                per-tap strided-window copies).
    w_ref     : (9, C, C) per-tap block-diagonal weights, BN scale folded in.
    o_ref     : (1, H, W, C)

    The matmuls are computed at padded width W+2; the two wrap-around columns
    per row are garbage and are simply not stored.
    """
    C = o_ref.shape[-1]
    L = H * Wp2
    acc = jnp.zeros((L, C), jnp.float32)
    for t in range(9):
        ky, kx = divmod(t, 3)
        off = ky * Wp2 + kx
        tap = xflat_ref[0, off:off + L, :]
        acc = acc + jnp.dot(tap, w_ref[t], preferred_element_type=jnp.float32)
    shift = shift_ref[...]                                 # (1, C)
    for y in range(H):
        row = acc[y * Wp2:y * Wp2 + W, :] + shift          # (W, C), drops halo cols
        o_ref[0, y] = jnp.maximum(row, 0.0).astype(o_ref.dtype)


def grouped_conv3x3_bn_relu(xflat, w9, shift, *, H, W, out_dtype):
    N, Lp, C = xflat.shape
    Wp2 = W + 2
    return pl.pallas_call(
        functools.partial(_gconv3x3_bn_relu_kernel, H=H, W=W, Wp2=Wp2),
        out_shape=jax.ShapeDtypeStruct((N, H, W, C), out_dtype),
        grid=(N,),
        in_specs=[
            pl.BlockSpec((1, Lp, C), lambda n: (n, 0, 0)),
            pl.BlockSpec((9, C, C), lambda n: (0, 0, 0)),
            pl.BlockSpec((1, C), lambda n: (0, 0)),
        ],
        out_specs=pl.BlockSpec((1, H, W, C), lambda n: (n, 0, 0, 0)),
        compiler_params=pltpu.CompilerParams(
            dimension_semantics=("parallel",),
            vmem_limit_bytes=48 * 1024 * 1024),
    )(xflat, w9, shift)


def _pw_conv_bn_pool_kernel(x_ref, w_ref, shift_ref,
                            y_ref, avg_ref, max_ref, sum_acc, max_acc, *, inv_hw):
    """conv3 (1x1, BN scale folded) + shift, fused with global avg/max pooling.

    Grid is (N, HW//tr); the second axis is the reduction axis (accumulators in
    VMEM scratch, init at r==0, finalize at the last tile of each image)."""
    r = pl.program_id(1)
    y = jnp.dot(x_ref[0], w_ref[...], preferred_element_type=jnp.float32)
    y = y + shift_ref[...]
    y_ref[0] = y.astype(y_ref.dtype)

    @pl.when(r == 0)
    def _():
        sum_acc[...] = jnp.zeros(sum_acc.shape, jnp.float32)
        max_acc[...] = jnp.full(max_acc.shape, -jnp.inf, jnp.float32)

    sum_acc[...] += jnp.sum(y, axis=0, keepdims=True)
    max_acc[...] = jnp.maximum(max_acc[...], jnp.max(y, axis=0, keepdims=True))

    @pl.when(r == pl.num_programs(1) - 1)
    def _():
        avg_ref[0] = sum_acc[...] * inv_hw
        max_ref[0] = max_acc[...]


def pointwise_conv_bn_pool(h2, w_scaled, shift, *, out_dtype, tr_cap=1024):
    N, HW, cin = h2.shape
    cout = w_scaled.shape[1]
    tr = _pick_tile(HW, tr_cap)
    return pl.pallas_call(
        functools.partial(_pw_conv_bn_pool_kernel, inv_hw=1.0 / HW),
        out_shape=(jax.ShapeDtypeStruct((N, HW, cout), out_dtype),
                   jax.ShapeDtypeStruct((N, 1, cout), jnp.float32),
                   jax.ShapeDtypeStruct((N, 1, cout), jnp.float32)),
        grid=(N, HW // tr),
        in_specs=[
            pl.BlockSpec((1, tr, cin), lambda n, r: (n, r, 0)),
            pl.BlockSpec((cin, cout), lambda n, r: (0, 0)),
            pl.BlockSpec((1, cout), lambda n, r: (0, 0)),
        ],
        out_specs=(
            pl.BlockSpec((1, tr, cout), lambda n, r: (n, r, 0)),
            pl.BlockSpec((1, 1, cout), lambda n, r: (n, 0, 0)),
            pl.BlockSpec((1, 1, cout), lambda n, r: (n, 0, 0)),
        ),
        scratch_shapes=[pltpu.VMEM((1, cout), jnp.float32),
                        pltpu.VMEM((1, cout), jnp.float32)],
        compiler_params=pltpu.CompilerParams(
            dimension_semantics=("parallel", "arbitrary"),
            vmem_limit_bytes=64 * 1024 * 1024),
    )(h2, w_scaled, shift)


def _channel_mlp_kernel(avg_ref, max_ref, w1_ref, w2_ref, ca_ref):
    """CBAM channel-attention MLP, batched over all N images at once."""
    f32 = jnp.float32

    def mlp(v):                                            # v: (N, C)
        h = jnp.maximum(jnp.dot(v, w1_ref[...], preferred_element_type=f32), 0.0)
        return jnp.dot(h, w2_ref[...], preferred_element_type=f32)

    ca_ref[...] = jax.nn.sigmoid(mlp(avg_ref[...]) + mlp(max_ref[...]))


def channel_attention(avg2d, max2d, wfc1, wfc2):
    N, C = avg2d.shape
    cr = wfc1.shape[1]
    return pl.pallas_call(
        _channel_mlp_kernel,
        out_shape=jax.ShapeDtypeStruct((N, C), jnp.float32),
        grid=(1,),
        in_specs=[
            pl.BlockSpec((N, C), lambda i: (0, 0)),
            pl.BlockSpec((N, C), lambda i: (0, 0)),
            pl.BlockSpec((C, cr), lambda i: (0, 0)),
            pl.BlockSpec((cr, C), lambda i: (0, 0)),
        ],
        out_specs=pl.BlockSpec((N, C), lambda i: (0, 0)),
    )(avg2d, max2d, wfc1, wfc2)


def _spatial_attention_residual_kernel(h3_ref, ca_ref, r_ref, kavg_ref, kmax_ref,
                                       res_ref, o_ref, *, H, W):
    """Per-image: channel gating, channel mean/max stats, 7x7 spatial attention
    (host-precomputed banded matrices), spatial gating, residual add, ReLU.

    7x7 'same' conv: sa_in = sum_d R[d] @ (mean @ Kavg[d] + max @ Kmax[d]),
    with Kavg[d] = sum_dx w_avg[d, dx] * shift_dx precombined host-side, so the
    zero padding falls out of the matrix bounds and no in-kernel masks/iotas or
    per-tap scalar loops are needed."""
    C = h3_ref.shape[-1]
    f32 = jnp.float32

    y = h3_ref[0].astype(f32) * ca_ref[...]                 # (H, W, C) * (1,1,C)
    mean_c = jnp.mean(y, axis=-1)                           # (H, W)
    max_c = jnp.max(y, axis=-1)                             # (H, W)

    acc = jnp.zeros((H, W), f32)
    for d in range(7):
        inner = (jnp.dot(mean_c, kavg_ref[d], preferred_element_type=f32)
                 + jnp.dot(max_c, kmax_ref[d], preferred_element_type=f32))
        acc = acc + jnp.dot(r_ref[d], inner, preferred_element_type=f32)
    sa = jax.nn.sigmoid(acc)

    out = y * sa.reshape(H, W, 1) + res_ref[0].astype(f32)
    o_ref[0] = jnp.maximum(out, 0.0).astype(o_ref.dtype)


def cbam_spatial_residual(h3_nhwc, ca, Rmat, Kavg, Kmax, res_nhwc):
    N, H, W, C = h3_nhwc.shape
    return pl.pallas_call(
        functools.partial(_spatial_attention_residual_kernel, H=H, W=W),
        out_shape=jax.ShapeDtypeStruct((N, H, W, C), res_nhwc.dtype),
        grid=(N,),
        in_specs=[
            pl.BlockSpec((1, H, W, C), lambda n: (n, 0, 0, 0)),
            pl.BlockSpec((1, 1, C), lambda n: (n, 0, 0)),
            pl.BlockSpec((7, H, H), lambda n: (0, 0, 0)),
            pl.BlockSpec((7, W, W), lambda n: (0, 0, 0)),
            pl.BlockSpec((7, W, W), lambda n: (0, 0, 0)),
            pl.BlockSpec((1, H, W, C), lambda n: (n, 0, 0, 0)),
        ],
        out_specs=pl.BlockSpec((1, H, W, C), lambda n: (n, 0, 0, 0)),
        compiler_params=pltpu.CompilerParams(
            dimension_semantics=("parallel",),
            vmem_limit_bytes=48 * 1024 * 1024),
    )(h3_nhwc, ca, Rmat, Kavg, Kmax, res_nhwc)


# ----------------------------- parameters ----------------------------------

def make_params(key, inplanes, planes, num_group):
    cmid = planes * 2
    cout = planes * 4
    cr = cout // 16
    ks = jax.random.split(key, 9)
    p = {}
    p["w1"] = jax.random.normal(ks[0], (cmid, inplanes, 1, 1), jnp.float32) * 0.1
    p["w2"] = jax.random.normal(ks[1], (cmid, cmid // num_group, 3, 3),
                                jnp.float32) * 0.1
    p["w3"] = jax.random.normal(ks[2], (cout, cmid, 1, 1), jnp.float32) * 0.1
    p["wfc1"] = jax.random.normal(ks[3], (cr, cout, 1, 1), jnp.float32) * 0.2
    p["wfc2"] = jax.random.normal(ks[4], (cout, cr, 1, 1), jnp.float32) * 0.2
    p["wsa"] = jax.random.normal(ks[5], (1, 2, 7, 7), jnp.float32) * 0.2

    def bn_params(k, c):
        k1, k2, k3, k4 = jax.random.split(k, 4)
        gamma = 1.0 + 0.1 * jax.random.normal(k1, (c,), jnp.float32)
        beta = 0.1 * jax.random.normal(k2, (c,), jnp.float32)
        mean = 0.1 * jax.random.normal(k3, (c,), jnp.float32)
        var = jax.random.uniform(k4, (c,), jnp.float32, minval=0.5, maxval=1.5)
        return gamma, beta, mean, var

    p["bn1"] = bn_params(ks[6], cmid)
    p["bn2"] = bn_params(ks[7], cmid)
    p["bn3"] = bn_params(ks[8], cout)
    return p


# ----------------------------- forward pass --------------------------------

def bottleneck_forward(x_nchw, p, *, num_group, compute_dtype=jnp.float32,
                       tm_cap=1024, tr_cap=1024):
    """compute_dtype controls matmul operands / inter-kernel activations
    (bf16 halves HBM traffic); accumulation and epilogues stay in float32."""
    N, cin, H, W = x_nchw.shape
    cmid = p["w1"].shape[0]
    cout = p["w3"].shape[0]
    assert cin == cout, "identity residual requires inplanes == planes*4"
    M = N * H * W
    eps = 1e-5

    def bn_fold(bn):
        gamma, beta, mean, var = bn
        scale = gamma / jnp.sqrt(var + eps)
        shift = beta - mean * scale
        return scale, shift

    x_nhwc = jnp.transpose(x_nchw, (0, 2, 3, 1))            # (N, H, W, cin)
    x2d = x_nhwc.reshape(M, cin)

    # --- conv1 (1x1) + bn1 + relu : BN scale folded into the weights
    s1, b1 = bn_fold(p["bn1"])
    w1 = (jnp.transpose(p["w1"][:, :, 0, 0]) * s1[None, :]).astype(compute_dtype)
    h1 = pointwise_conv_bn(x2d.astype(compute_dtype), w1,
                           b1[None, :].astype(jnp.float32),
                           relu=True, out_dtype=compute_dtype, tm_cap=tm_cap)

    # --- conv2 (3x3, grouped, pad=1, stride=1) + bn2 + relu
    # per-tap block-diagonal weights w9[t, ci, co], BN scale folded in.
    cg = cmid // num_group
    w2_t = jnp.transpose(p["w2"], (2, 3, 1, 0)).reshape(9, cg, cmid)
    w9 = jnp.zeros((9, cmid, cmid), jnp.float32)
    for g in range(num_group):
        w9 = w9.at[:, g * cg:(g + 1) * cg, g * cg:(g + 1) * cg].set(
            w2_t[:, :, g * cg:(g + 1) * cg])
    s2, b2 = bn_fold(p["bn2"])
    w9 = (w9 * s2[None, None, :]).astype(compute_dtype)
    # Zero-pad once (1 top / 2 bottom / 1 left / 1 right) and flatten the rows so
    # each of the 9 taps is a contiguous slice in the kernel.  The extra bottom
    # row keeps the last tap slices in bounds; it only feeds the dropped columns.
    # TODO(synk): build this halo in-kernel to skip the extra HBM pass of h1.
    Wp2 = W + 2
    xpad = jnp.pad(h1.reshape(N, H, W, cmid), ((0, 0), (1, 2), (1, 1), (0, 0)))
    xflat = xpad.reshape(N, (H + 3) * Wp2, cmid)
    h2 = grouped_conv3x3_bn_relu(xflat, w9, b2[None, :].astype(jnp.float32),
                                 H=H, W=W, out_dtype=compute_dtype)   # (N,H,W,cmid)

    # --- conv3 (1x1) + bn3, fused with global avg/max pooling
    s3, b3 = bn_fold(p["bn3"])
    w3 = (jnp.transpose(p["w3"][:, :, 0, 0]) * s3[None, :]).astype(compute_dtype)
    h3, avg, mx = pointwise_conv_bn_pool(h2.reshape(N, H * W, cmid), w3,
                                         b3[None, :].astype(jnp.float32),
                                         out_dtype=compute_dtype, tr_cap=tr_cap)

    # --- channel-attention MLP, batched over all images in one tiny kernel
    wfc1 = jnp.transpose(p["wfc1"][:, :, 0, 0]).astype(jnp.float32)   # (cout, cr)
    wfc2 = jnp.transpose(p["wfc2"][:, :, 0, 0]).astype(jnp.float32)   # (cr, cout)
    ca2d = channel_attention(avg.reshape(N, cout), mx.reshape(N, cout), wfc1, wfc2)
    ca = ca2d.reshape(N, 1, cout)

    # --- 7x7 spatial attention + gating + residual + relu
    R_np, Cb_np = _shift_bases(H, W)
    Cb = jnp.asarray(Cb_np)
    Kavg = jnp.einsum("dj,jab->dab", p["wsa"][0, 0], Cb).astype(jnp.float32)
    Kmax = jnp.einsum("dj,jab->dab", p["wsa"][0, 1], Cb).astype(jnp.float32)
    out_nhwc = cbam_spatial_residual(h3.reshape(N, H, W, cout), ca,
                                     jnp.asarray(R_np), Kavg, Kmax, x_nhwc)
    return jnp.transpose(out_nhwc, (0, 3, 1, 2))


# --------------------------- pure-JAX reference -----------------------------

def reference_forward(x_nchw, p, *, num_group):
    eps = 1e-5

    def conv(x, w, stride=1, padding=0, groups=1):
        return lax.conv_general_dilated(
            x, w, window_strides=(stride, stride),
            padding=((padding, padding), (padding, padding)),
            dimension_numbers=("NCHW", "OIHW", "NCHW"),
            feature_group_count=groups)

    def bn(x, params):
        gamma, beta, mean, var = params
        inv = gamma / jnp.sqrt(var + eps)
        return ((x - mean[None, :, None, None]) * inv[None, :, None, None]
                + beta[None, :, None, None])

    relu = jax.nn.relu
    out = relu(bn(conv(x_nchw, p["w1"]), p["bn1"]))
    out = relu(bn(conv(out, p["w2"], padding=1, groups=num_group), p["bn2"]))
    out = bn(conv(out, p["w3"]), p["bn3"])
    avg = jnp.mean(out, axis=(2, 3), keepdims=True)
    mx = jnp.max(out, axis=(2, 3), keepdims=True)

    def mlp(v):
        return conv(relu(conv(v, p["wfc1"])), p["wfc2"])

    ca = jax.nn.sigmoid(mlp(avg) + mlp(mx))
    out = ca * out
    mean_c = jnp.mean(out, axis=1, keepdims=True)
    max_c = jnp.max(out, axis=1, keepdims=True)
    s = jnp.concatenate([mean_c, max_c], axis=1)
    sa = jax.nn.sigmoid(conv(s, p["wsa"], padding=3))
    out = sa * out
    out = relu(out + x_nchw)
    return out


# --------------------------------- main -------------------------------------

if __name__ == "__main__":
    N, H, W = 2, 16, 16
    planes = 8
    inplanes = planes * 4      # residual add requires inplanes == planes*4
    num_group = 4              # planes*2 (=16) divisible by num_group

    key = jax.random.PRNGKey(0)
    kx_, kp = jax.random.split(key)
    x = jax.random.normal(kx_, (N, inplanes, H, W), jnp.float32)
    params = make_params(kp, inplanes, planes, num_group)

    ref = jax.block_until_ready(reference_forward(x, params, num_group=num_group))

    # default (large, 256-aligned) tiles, f32
    out = jax.block_until_ready(bottleneck_forward(x, params, num_group=num_group))
    assert out.shape == ref.shape == (N, inplanes, H, W)
    np.testing.assert_allclose(np.asarray(out), np.asarray(ref),
                               rtol=2e-3, atol=2e-3)

    # small tiles: exercises multi-step M grids and the pooling accumulator path
    out_small = jax.block_until_ready(
        bottleneck_forward(x, params, num_group=num_group, tm_cap=128, tr_cap=64))
    np.testing.assert_allclose(np.asarray(out_small), np.asarray(ref),
                               rtol=2e-3, atol=2e-3)

    # bf16 matmul operands (f32 accumulation / epilogue), loose tolerance
    out_bf16 = jax.block_until_ready(
        bottleneck_forward(x, params, num_group=num_group,
                           compute_dtype=jnp.bfloat16))
    np.testing.assert_allclose(np.asarray(out_bf16), np.asarray(ref),
                               rtol=1e-1, atol=1e-1)

    print("KERNEL_OK")
</pallas_src>

<mosaic_0001>
module attributes {stable_mosaic.version = 11 : i64} {
  func.func @_pw_conv_bn_kernel(%arg0: i32, %arg1: memref<512x32xf32, #tpu.memory_space<vmem>>, %arg2: memref<32x16xf32, #tpu.memory_space<vmem>>, %arg3: memref<1x16xf32, #tpu.memory_space<vmem>>, %arg4: memref<512x16xf32, #tpu.memory_space<vmem>>) attributes {dimension_semantics = [#tpu.dimension_semantics<parallel>], iteration_bounds = array<i64: 1>, scalar_prefetch = 0 : i64, scratch_operands = 0 : i64, tpu.core_type = #tpu.core_type<tc>, window_params = [{transform_indices = @transform_0, window_bounds = array<i64: 512, 32>}, {pipeline_mode = #tpu.pipeline_mode<synchronous>, transform_indices = @transform_1, window_bounds = array<i64: 32, 16>}, {pipeline_mode = #tpu.pipeline_mode<synchronous>, transform_indices = @transform_2, window_bounds = array<i64: 1, 16>}, {transform_indices = @transform_3, window_bounds = array<i64: 512, 16>}]} {
    %c0 = arith.constant 0 : index
    %c0_0 = arith.constant 0 : index
    %0 = vector.load %arg1[%c0, %c0_0] : memref<512x32xf32, #tpu.memory_space<vmem>>, vector<512x32xf32>
    %c0_1 = arith.constant 0 : index
    %c0_2 = arith.constant 0 : index
    %1 = vector.load %arg2[%c0_1, %c0_2] : memref<32x16xf32, #tpu.memory_space<vmem>>, vector<32x16xf32>
    %cst = arith.constant dense<0.000000e+00> : vector<512x16xf32>
    %2 = tpu.matmul %0, %1, %cst {dimension_numbers = #tpu.dot_dimension_numbers<[1], [0], [0], [1], [0, 0, 1, 1], [], []>} : vector<512x32xf32>, vector<32x16xf32>, vector<512x16xf32> -> vector<512x16xf32>
    %c0_3 = arith.constant 0 : index
    %c0_4 = arith.constant 0 : index
    %3 = vector.load %arg3[%c0_3, %c0_4] : memref<1x16xf32, #tpu.memory_space<vmem>>, vector<1x16xf32>
    %4 = vector.broadcast %3 : vector<1x16xf32> to vector<512x16xf32>
    %5 = arith.addf %2, %4 : vector<512x16xf32>
    %cst_5 = arith.constant 0.000000e+00 : f32
    %6 = vector.broadcast %cst_5 : f32 to vector<512x16xf32>
    %7 = arith.maximumf %5, %6 : vector<512x16xf32>
    %c0_6 = arith.constant 0 : index
    %c0_7 = arith.constant 0 : index
    %8 = vector.load %arg4[%c0_6, %c0_7] : memref<512x16xf32, #tpu.memory_space<vmem>>, vector<512x16xf32>
    tpu.vector_store %arg4[%c0_6, %c0_7], %7 {strides = array<i32>} : memref<512x16xf32, #tpu.memory_space<vmem>>, vector<512x16xf32>,
    return
  }
  func.func @transform_0(%arg0: i32) -> (i32, i32) {
    %c0_i32 = arith.constant 0 : i32
    %c0_i32_0 = arith.constant 0 : i32
    return %arg0, %c0_i32 : i32, i32
  }
  func.func @transform_1(%arg0: i32) -> (i32, i32) {
    %c0_i32 = arith.constant 0 : i32
    %c0_i32_0 = arith.constant 0 : i32
    %c0_i32_1 = arith.constant 0 : i32
    return %c0_i32, %c0_i32_0 : i32, i32
  }
  func.func @transform_2(%arg0: i32) -> (i32, i32) {
    %c0_i32 = arith.constant 0 : i32
    %c0_i32_0 = arith.constant 0 : i32
    %c0_i32_1 = arith.constant 0 : i32
    return %c0_i32, %c0_i32_0 : i32, i32
  }
  func.func @transform_3(%arg0: i32) -> (i32, i32) {
    %c0_i32 = arith.constant 0 : i32
    %c0_i32_0 = arith.constant 0 : i32
    return %arg0, %c0_i32 : i32, i32
  }
}

</mosaic_0001>

<llo_original>
// kernel: tpu_custom_call.1
$region0: #{tpu_custom_call.1}
  #allocation0 [shape = 'u32[]', space=smem, size = 0x4, offset = 0x4, fixed_abs, tag = 'smem constant byte address 0x4 - core index']
  #allocation1 [shape = 'u32[72,128]{1,0:T(1,128)}', space=vmem, size = 0x9000, scoped, tag = 'internal scratch']
  %s0 = inlined_call_operand.vmem [shape: f32[512,32], index: 0, kind: input, shape index: {}]
  %s1 = inlined_call_operand.vmem [shape: f32[32,16], index: 1, kind: input, shape index: {}]
  %s2 = inlined_call_operand.vmem [shape: f32[1,16], index: 2, kind: input, shape index: {}]
  %s3 = inlined_call_operand.vmem [shape: f32[512,16], index: 3, kind: output, shape index: {}]
  %s4 = sld [smem:[#allocation0]]
  $region22: #{tpu_custom_call.1} parent=0
    _
  %s6 = ssub.s32 1, %s4
  %s7 = scalar_select 0, %s6, %s4
  // Predicated region
  $region2: #{tpu_custom_call.1} parent=0 // pred_check
    _
  $region3: #{tpu_custom_call.1} parent=0 // pred_check_branch
    %9 = sbr.rel (0) target = $region5
  $region4: #{tpu_custom_call.1} parent=0 // pred_region
    _
  $region5: #{tpu_custom_call.1} parent=0 // pred_fallthru
    _
  // Predicated region
  $region6: #{tpu_custom_call.1} parent=0 // pred_check
    _
  $region7: #{tpu_custom_call.1} parent=0 // pred_check_branch
    %11 = sbr.rel (0) target = $region9
  $region8: #{tpu_custom_call.1} parent=0 // pred_region
    _
  $region9: #{tpu_custom_call.1} parent=0 // pred_fallthru
    _
  // Predicated region
  $region10: #{tpu_custom_call.1} parent=0 // pred_check
    _
  $region11: #{tpu_custom_call.1} parent=0 // pred_check_branch
    %13 = sbr.rel (0) target = $region13
  $region12: #{tpu_custom_call.1} parent=0 // pred_region
    _
  $region13: #{tpu_custom_call.1} parent=0 // pred_fallthru
    _
  %v14 = vld [vmem:[%s0] sm:$0xff]
  %v15 = vld [vmem:[%s0 + $0x8] sm:$0xff]
  %v16 = vld [vmem:[%s0 + $0x10] sm:$0xff]
  %v17 = vld [vmem:[%s0 + $0x18] sm:$0xff]
  %v18 = vld [vmem:[%s0 + $0x20] sm:$0xff]
  %v19 = vld [vmem:[%s0 + $0x28] sm:$0xff]
  %v20 = vld [vmem:[%s0 + $0x30] sm:$0xff]
  %v21 = vld [vmem:[%s0 + $0x38] sm:$0xff]
  %v22 = vld [vmem:[%s0 + $0x40] sm:$0xff]
  %v23 = vld [vmem:[%s0 + $0x48] sm:$0xff]
  %v24 = vld [vmem:[%s0 + $0x50] sm:$0xff]
  %v25 = vld [vmem:[%s0 + $0x58] sm:$0xff]
  %v26 = vld [vmem:[%s0 + $0x60] sm:$0xff]
  %v27 = vld [vmem:[%s0 + $0x68] sm:$0xff]
  %v28 = vld [vmem:[%s0 + $0x70] sm:$0xff]
  %v29 = vld [vmem:[%s0 + $0x78] sm:$0xff]
  %v30 = vld [vmem:[%s0 + $0x80] sm:$0xff]
  %v31 = vld [vmem:[%s0 + $0x88] sm:$0xff]
  %v32 = vld [vmem:[%s0 + $0x90] sm:$0xff]
  %v33 = vld [vmem:[%s0 + $0x98] sm:$0xff]
  %v34 = vld [vmem:[%s0 + $0xa0] sm:$0xff]
  %v35 = vld [vmem:[%s0 + $0xa8] sm:$0xff]
  %v36 = vld [vmem:[%s0 + $0xb0] sm:$0xff]
  %v37 = vld [vmem:[%s0 + $0xb8] sm:$0xff]
  %v38 = vld [vmem:[%s0 + $0xc0] sm:$0xff]
  %v39 = vld [vmem:[%s0 + $0xc8] sm:$0xff]
  %v40 = vld [vmem:[%s0 + $0xd0] sm:$0xff]
  %v41 = vld [vmem:[%s0 + $0xd8] sm:$0xff]
  %v42 = vld [vmem:[%s0 + $0xe0] sm:$0xff]
  %v43 = vld [vmem:[%s0 + $0xe8] sm:$0xff]
  %v44 = vld [vmem:[%s0 + $0xf0] sm:$0xff]
  %v45 = vld [vmem:[%s0 + $0xf8] sm:$0xff]
  %v46 = vld [vmem:[%s0 + $0x100] sm:$0xff]
  %v47 = vld [vmem:[%s0 + $0x108] sm:$0xff]
  %v48 = vld [vmem:[%s0 + $0x110] sm:$0xff]
  %v49 = vld [vmem:[%s0 + $0x118] sm:$0xff]
  %v50 = vld [vmem:[%s0 + $0x120] sm:$0xff]
  %v51 = vld [vmem:[%s0 + $0x128] sm:$0xff]
  %v52 = vld [vmem:[%s0 + $0x130] sm:$0xff]
  %v53 = vld [vmem:[%s0 + $0x138] sm:$0xff]
  %v54 = vld [vmem:[%s0 + $0x140] sm:$0xff]
  %v55 = vld [vmem:[%s0 + $0x148] sm:$0xff]
  %v56 = vld [vmem:[%s0 + $0x150] sm:$0xff]
  %v57 = vld [vmem:[%s0 + $0x158] sm:$0xff]
  %v58 = vld [vmem:[%s0 + $0x160] sm:$0xff]
  %v59 = vld [vmem:[%s0 + $0x168] sm:$0xff]
  %v60 = vld [vmem:[%s0 + $0x170] sm:$0xff]
  %v61 = vld [vmem:[%s0 + $0x178] sm:$0xff]
  %v62 = vld [vmem:[%s0 + $0x180] sm:$0xff]
  %v63 = vld [vmem:[%s0 + $0x188] sm:$0xff]
  %v64 = vld [vmem:[%s0 + $0x190] sm:$0xff]
  %v65 = vld [vmem:[%s0 + $0x198] sm:$0xff]
  %v66 = vld [vmem:[%s0 + $0x1a0] sm:$0xff]
  %v67 = vld [vmem:[%s0 + $0x1a8] sm:$0xff]
  %v68 = vld [vmem:[%s0 + $0x1b0] sm:$0xff]
  %v69 = vld [vmem:[%s0 + $0x1b8] sm:$0xff]
  %v70 = vld [vmem:[%s0 + $0x1c0] sm:$0xff]
  %v71 = vld [vmem:[%s0 + $0x1c8] sm:$0xff]
  %v72 = vld [vmem:[%s0 + $0x1d0] sm:$0xff]
  %v73 = vld [vmem:[%s0 + $0x1d8] sm:$0xff]
  %v74 = vld [vmem:[%s0 + $0x1e0] sm:$0xff]
  %v75 = vld [vmem:[%s0 + $0x1e8] sm:$0xff]
  %v76 = vld [vmem:[%s0 + $0x1f0] sm:$0xff]
  %v77 = vld [vmem:[%s0 + $0x1f8] sm:$0xff]
  %v78 = vld [vmem:[%s1] sm:$0xff]
  %v79 = vld [vmem:[%s1 + $0x8] sm:$0xff]
  %v80 = vld [vmem:[%s1 + $0x10] sm:$0xff]
  %v81 = vld [vmem:[%s1 + $0x18] sm:$0xff]
  %v82 = vld [vmem:[%s2] sm:$0x1]
  %v84 = vperm.slane %v82, 0
  %vm86 = vcmask 261120
  %v88 = vsel %vm86, %v14, 0
  %v91 = vsel %vm86, %v15, 0
  %v94 = vsel %vm86, %v16, 0
  %v97 = vsel %vm86, %v17, 0
  %v100 = vsel %vm86, %v18, 0
  %v103 = vsel %vm86, %v19, 0
  %v106 = vsel %vm86, %v20, 0
  %v109 = vsel %vm86, %v21, 0
  %v112 = vsel %vm86, %v22, 0
  %v115 = vsel %vm86, %v23, 0
  %v118 = vsel %vm86, %v24, 0
  %v121 = vsel %vm86, %v25, 0
  %v124 = vsel %vm86, %v26, 0
  %v127 = vsel %vm86, %v27, 0
  %v130 = vsel %vm86, %v28, 0
  %v133 = vsel %vm86, %v29, 0
  %v136 = vsel %vm86, %v30, 0
  %v139 = vsel %vm86, %v31, 0
  %v142 = vsel %vm86, %v32, 0
  %v145 = vsel %vm86, %v33, 0
  %v148 = vsel %vm86, %v34, 0
  %v151 = vsel %vm86, %v35, 0
  %v154 = vsel %vm86, %v36, 0
  %v157 = vsel %vm86, %v37, 0
  %v160 = vsel %vm86, %v38, 0
  %v163 = vsel %vm86, %v39, 0
  %v166 = vsel %vm86, %v40, 0
  %v169 = vsel %vm86, %v41, 0
  %v172 = vsel %vm86, %v42, 0
  %v175 = vsel %vm86, %v43, 0
  %v178 = vsel %vm86, %v44, 0
  %v181 = vsel %vm86, %v45, 0
  %v184 = vsel %vm86, %v46, 0
  %v187 = vsel %vm86, %v47, 0
  %v190 = vsel %vm86, %v48, 0
  %v193 = vsel %vm86, %v49, 0
  %v196 = vsel %vm86, %v50, 0
  %v199 = vsel %vm86, %v51, 0
  %v202 = vsel %vm86, %v52, 0
  %v205 = vsel %vm86, %v53, 0
  %v208 = vsel %vm86, %v54, 0
  %v211 = vsel %vm86, %v55, 0
  %v214 = vsel %vm86, %v56, 0
  %v217 = vsel %vm86, %v57, 0
  %v220 = vsel %vm86, %v58, 0
  %v223 = vsel %vm86, %v59, 0
  %v226 = vsel %vm86, %v60, 0
  %v229 = vsel %vm86, %v61, 0
  %v232 = vsel %vm86, %v62, 0
  %v235 = vsel %vm86, %v63, 0
  %v238 = vsel %vm86, %v64, 0
  %v241 = vsel %vm86, %v65, 0
  %v244 = vsel %vm86, %v66, 0
  %v247 = vsel %vm86, %v67, 0
  %v250 = vsel %vm86, %v68, 0
  %v253 = vsel %vm86, %v69, 0
  %v256 = vsel %vm86, %v70, 0
  %v259 = vsel %vm86, %v71, 0
  %v262 = vsel %vm86, %v72, 0
  %v265 = vsel %vm86, %v73, 0
  %v268 = vsel %vm86, %v74, 0
  %v271 = vsel %vm86, %v75, 0
  %v274 = vsel %vm86, %v76, 0
  %v277 = vsel %vm86, %v77, 0
  %279 = vmatpush.msra.mxu0 0.0
  %280 = vmatpush.msra.mxu0 0.0
  %281 = vmatpush.msra.mxu0 0.0
  %282 = vmatpush.msra.mxu0 0.0
  %283 = vmatpush.msra.mxu0 0.0
  %284 = vmatpush.msra.mxu0 0.0
  %285 = vmatpush.msra.mxu0 0.0
  %286 = vmatpush.msra.mxu0 0.0
  %287 = vmatpush.msra.mxu0 0.0
  %288 = vmatpush.msra.mxu0 0.0
  %289 = vmatpush.msra.mxu0 0.0
  %290 = vmatpush.msra.mxu0 0.0
  %291 = vmatpush.msra.mxu0 %v81
  %292 = vmatpush.msra.mxu0 %v80
  %293 = vmatpush.msra.mxu0 %v79
  %294 = vmatpush.msra.mxu0 %v78
  %295 = vmatmul.f32.gmra.mxu0 %v88
  %v296 = vpop.f32.mrf.mxu0
  %v297 = vadd.f32 %v84, %v296
  %298 = vmatmul.f32.gmra.mxu0 %v91
  %v299 = vpop.f32.mrf.mxu0
  %v300 = vadd.f32 %v84, %v299
  %301 = vmatmul.f32.gmra.mxu0 %v94
  %v302 = vpop.f32.mrf.mxu0
  %v303 = vadd.f32 %v84, %v302
  %304 = vmatmul.f32.gmra.mxu0 %v97
  %v305 = vpop.f32.mrf.mxu0
  %v306 = vadd.f32 %v84, %v305
  %307 = vmatmul.f32.gmra.mxu0 %v100
  %v308 = vpop.f32.mrf.mxu0
  %v309 = vadd.f32 %v84, %v308
  %310 = vmatmul.f32.gmra.mxu0 %v103
  %v311 = vpop.f32.mrf.mxu0
  %v312 = vadd.f32 %v84, %v311
  %313 = vmatmul.f32.gmra.mxu0 %v106
  %v314 = vpop.f32.mrf.mxu0
  %v315 = vadd.f32 %v84, %v314
  %316 = vmatmul.f32.gmra.mxu0 %v109
  %v317 = vpop.f32.mrf.mxu0
  %v318 = vadd.f32 %v84, %v317
  %319 = vmatmul.f32.gmra.mxu0 %v112
  %v320 = vpop.f32.mrf.mxu0
  %v321 = vadd.f32 %v84, %v320
  %322 = vmatmul.f32.gmra.mxu0 %v115
  %v323 = vpop.f32.mrf.mxu0
  %v324 = vadd.f32 %v84, %v323
  %325 = vmatmul.f32.gmra.mxu0 %v118
  %v326 = vpop.f32.mrf.mxu0
  %v327 = vadd.f32 %v84, %v326
  %328 = vmatmul.f32.gmra.mxu0 %v121
  %v329 = vpop.f32.mrf.mxu0
  %v330 = vadd.f32 %v84, %v329
  %331 = vmatmul.f32.gmra.mxu0 %v124
  %v332 = vpop.f32.mrf.mxu0
  %v333 = vadd.f32 %v84, %v332
  %334 = vmatmul.f32.gmra.mxu0 %v127
  %v335 = vpop.f32.mrf.mxu0
  %v336 = vadd.f32 %v84, %v335
  %337 = vmatmul.f32.gmra.mxu0 %v130
  %v338 = vpop.f32.mrf.mxu0
  %v339 = vadd.f32 %v84, %v338
  %340 = vmatmul.f32.gmra.mxu0 %v133
  %v341 = vpop.f32.mrf.mxu0
  %v342 = vadd.f32 %v84, %v341
  %343 = vmatmul.f32.gmra.mxu0 %v136
  %v344 = vpop.f32.mrf.mxu0
  %v345 = vadd.f32 %v84, %v344
  %346 = vmatmul.f32.gmra.mxu0 %v139
  %v347 = vpop.f32.mrf.mxu0
  %v348 = vadd.f32 %v84, %v347
  %349 = vmatmul.f32.gmra.mxu0 %v142
  %v350 = vpop.f32.mrf.mxu0
  %v351 = vadd.f32 %v84, %v350
  %352 = vmatmul.f32.gmra.mxu0 %v145
  %v353 = vpop.f32.mrf.mxu0
  %v354 = vadd.f32 %v84, %v353
  %355 = vmatmul.f32.gmra.mxu0 %v148
  %v356 = vpop.f32.mrf.mxu0
  %v357 = vadd.f32 %v84, %v356
  %358 = vmatmul.f32.gmra.mxu0 %v151
  %v359 = vpop.f32.mrf.mxu0
  %v360 = vadd.f32 %v84, %v359
  %361 = vmatmul.f32.gmra.mxu0 %v154
  %v362 = vpop.f32.mrf.mxu0
  %v363 = vadd.f32 %v84, %v362
  %364 = vmatmul.f32.gmra.mxu0 %v157
  %v365 = vpop.f32.mrf.mxu0
  %v366 = vadd.f32 %v84, %v365
  %367 = vmatmul.f32.gmra.mxu0 %v160
  %v368 = vpop.f32.mrf.mxu0
  %v369 = vadd.f32 %v84, %v368
  %370 = vmatmul.f32.gmra.mxu0 %v163
  %v371 = vpop.f32.mrf.mxu0
  %v372 = vadd.f32 %v84, %v371
  %373 = vmatmul.f32.gmra.mxu0 %v166
  %v374 = vpop.f32.mrf.mxu0
  %v375 = vadd.f32 %v84, %v374
  %376 = vmatmul.f32.gmra.mxu0 %v169
  %v377 = vpop.f32.mrf.mxu0
  %v378 = vadd.f32 %v84, %v377
  %379 = vmatmul.f32.gmra.mxu0 %v172
  %v380 = vpop.f32.mrf.mxu0
  %v381 = vadd.f32 %v84, %v380
  %382 = vmatmul.f32.gmra.mxu0 %v175
  %v383 = vpop.f32.mrf.mxu0
  %v384 = vadd.f32 %v84, %v383
  %385 = vmatmul.f32.gmra.mxu0 %v178
  %v386 = vpop.f32.mrf.mxu0
  %v387 = vadd.f32 %v84, %v386
  %388 = vmatmul.f32.gmra.mxu0 %v181
  %v389 = vpop.f32.mrf.mxu0
  %v390 = vadd.f32 %v84, %v389
  %391 = vmatmul.f32.gmra.mxu0 %v184
  %v392 = vpop.f32.mrf.mxu0
  %v393 = vadd.f32 %v84, %v392
  %394 = vmatmul.f32.gmra.mxu0 %v187
  %v395 = vpop.f32.mrf.mxu0
  %v396 = vadd.f32 %v84, %v395
  %397 = vmatmul.f32.gmra.mxu0 %v190
  %v398 = vpop.f32.mrf.mxu0
  %v399 = vadd.f32 %v84, %v398
  %400 = vmatmul.f32.gmra.mxu0 %v193
  %v401 = vpop.f32.mrf.mxu0
  %v402 = vadd.f32 %v84, %v401
  %403 = vmatmul.f32.gmra.mxu0 %v196
  %v404 = vpop.f32.mrf.mxu0
  %v405 = vadd.f32 %v84, %v404
  %406 = vmatmul.f32.gmra.mxu0 %v199
  %v407 = vpop.f32.mrf.mxu0
  %v408 = vadd.f32 %v84, %v407
  %409 = vmatmul.f32.gmra.mxu0 %v202
  %v410 = vpop.f32.mrf.mxu0
  %v411 = vadd.f32 %v84, %v410
  %412 = vmatmul.f32.gmra.mxu0 %v205
  %v413 = vpop.f32.mrf.mxu0
  %v414 = vadd.f32 %v84, %v413
  %415 = vmatmul.f32.gmra.mxu0 %v208
  %v416 = vpop.f32.mrf.mxu0
  %v417 = vadd.f32 %v84, %v416
  %418 = vmatmul.f32.gmra.mxu0 %v211
  %v419 = vpop.f32.mrf.mxu0
  %v420 = vadd.f32 %v84, %v419
  %421 = vmatmul.f32.gmra.mxu0 %v214
  %v422 = vpop.f32.mrf.mxu0
  %v423 = vadd.f32 %v84, %v422
  %424 = vmatmul.f32.gmra.mxu0 %v217
  %v425 = vpop.f32.mrf.mxu0
  %v426 = vadd.f32 %v84, %v425
  %427 = vmatmul.f32.gmra.mxu0 %v220
  %v428 = vpop.f32.mrf.mxu0
  %v429 = vadd.f32 %v84, %v428
  %430 = vmatmul.f32.gmra.mxu0 %v223
  %v431 = vpop.f32.mrf.mxu0
  %v432 = vadd.f32 %v84, %v431
  %433 = vmatmul.f32.gmra.mxu0 %v226
  %v434 = vpop.f32.mrf.mxu0
  %v435 = vadd.f32 %v84, %v434
  %436 = vmatmul.f32.gmra.mxu0 %v229
  %v437 = vpop.f32.mrf.mxu0
  %v438 = vadd.f32 %v84, %v437
  %439 = vmatmul.f32.gmra.mxu0 %v232
  %v440 = vpop.f32.mrf.mxu0
  %v441 = vadd.f32 %v84, %v440
  %442 = vmatmul.f32.gmra.mxu0 %v235
  %v443 = vpop.f32.mrf.mxu0
  %v444 = vadd.f32 %v84, %v443
  %445 = vmatmul.f32.gmra.mxu0 %v238
  %v446 = vpop.f32.mrf.mxu0
  %v447 = vadd.f32 %v84, %v446
  %448 = vmatmul.f32.gmra.mxu0 %v241
  %v449 = vpop.f32.mrf.mxu0
  %v450 = vadd.f32 %v84, %v449
  %451 = vmatmul.f32.gmra.mxu0 %v244
  %v452 = vpop.f32.mrf.mxu0
  %v453 = vadd.f32 %v84, %v452
  %454 = vmatmul.f32.gmra.mxu0 %v247
  %v455 = vpop.f32.mrf.mxu0
  %v456 = vadd.f32 %v84, %v455
  %457 = vmatmul.f32.gmra.mxu0 %v250
  %v458 = vpop.f32.mrf.mxu0
  %v459 = vadd.f32 %v84, %v458
  %460 = vmatmul.f32.gmra.mxu0 %v253
  %v461 = vpop.f32.mrf.mxu0
  %v462 = vadd.f32 %v84, %v461
  %463 = vmatmul.f32.gmra.mxu0 %v256
  %v464 = vpop.f32.mrf.mxu0
  %v465 = vadd.f32 %v84, %v464
  %466 = vmatmul.f32.gmra.mxu0 %v259
  %v467 = vpop.f32.mrf.mxu0
  %v468 = vadd.f32 %v84, %v467
  %469 = vmatmul.f32.gmra.mxu0 %v262
  %v470 = vpop.f32.mrf.mxu0
  %v471 = vadd.f32 %v84, %v470
  %472 = vmatmul.f32.gmra.mxu0 %v265
  %v473 = vpop.f32.mrf.mxu0
  %v474 = vadd.f32 %v84, %v473
  %475 = vmatmul.f32.gmra.mxu0 %v268
  %v476 = vpop.f32.mrf.mxu0
  %v477 = vadd.f32 %v84, %v476
  %478 = vmatmul.f32.gmra.mxu0 %v271
  %v479 = vpop.f32.mrf.mxu0
  %v480 = vadd.f32 %v84, %v479
  %481 = vmatmul.f32.gmra.mxu0 %v274
  %v482 = vpop.f32.mrf.mxu0
  %v483 = vadd.f32 %v84, %v482
  %484 = vmatmul.f32.gmra.mxu0 %v277
  %v485 = vpop.f32.mrf.mxu0
  %v486 = vadd.f32 %v84, %v485
  %487 = vdwg.mxu0
  %v488 = vmax.f32 %v297, 0.0
  %v489 = vmax.f32 %v300, 0.0
  %v490 = vmax.f32 %v303, 0.0
  %v491 = vmax.f32 %v306, 0.0
  %v492 = vmax.f32 %v309, 0.0
  %v493 = vmax.f32 %v312, 0.0
  %v494 = vmax.f32 %v315, 0.0
  %v495 = vmax.f32 %v318, 0.0
  %v496 = vmax.f32 %v321, 0.0
  %v497 = vmax.f32 %v324, 0.0
  %v498 = vmax.f32 %v327, 0.0
  %v499 = vmax.f32 %v330, 0.0
  %v500 = vmax.f32 %v333, 0.0
  %v501 = vmax.f32 %v336, 0.0
  %v502 = vmax.f32 %v339, 0.0
  %v503 = vmax.f32 %v342, 0.0
  %v504 = vmax.f32 %v345, 0.0
  %v505 = vmax.f32 %v348, 0.0
  %v506 = vmax.f32 %v351, 0.0
  %v507 = vmax.f32 %v354, 0.0
  %v508 = vmax.f32 %v357, 0.0
  %v509 = vmax.f32 %v360, 0.0
  %v510 = vmax.f32 %v363, 0.0
  %v511 = vmax.f32 %v366, 0.0
  %v512 = vmax.f32 %v369, 0.0
  %v513 = vmax.f32 %v372, 0.0
  %v514 = vmax.f32 %v375, 0.0
  %v515 = vmax.f32 %v378, 0.0
  %v516 = vmax.f32 %v381, 0.0
  %v517 = vmax.f32 %v384, 0.0
  %v518 = vmax.f32 %v387, 0.0
  %v519 = vmax.f32 %v390, 0.0
  %v520 = vmax.f32 %v393, 0.0
  %v521 = vmax.f32 %v396, 0.0
  %v522 = vmax.f32 %v399, 0.0
  %v523 = vmax.f32 %v402, 0.0
  %v524 = vmax.f32 %v405, 0.0
  %v525 = vmax.f32 %v408, 0.0
  %v526 = vmax.f32 %v411, 0.0
  %v527 = vmax.f32 %v414, 0.0
  %v528 = vmax.f32 %v417, 0.0
  %v529 = vmax.f32 %v420, 0.0
  %v530 = vmax.f32 %v423, 0.0
  %v531 = vmax.f32 %v426, 0.0
  %v532 = vmax.f32 %v429, 0.0
  %v533 = vmax.f32 %v432, 0.0
  %v534 = vmax.f32 %v435, 0.0
  %v535 = vmax.f32 %v438, 0.0
  %v536 = vmax.f32 %v441, 0.0
  %v537 = vmax.f32 %v444, 0.0
  %v538 = vmax.f32 %v447, 0.0
  %v539 = vmax.f32 %v450, 0.0
  %v540 = vmax.f32 %v453, 0.0
  %v541 = vmax.f32 %v456, 0.0
  %v542 = vmax.f32 %v459, 0.0
  %v543 = vmax.f32 %v462, 0.0
  %v544 = vmax.f32 %v465, 0.0
  %v545 = vmax.f32 %v468, 0.0
  %v546 = vmax.f32 %v471, 0.0
  %v547 = vmax.f32 %v474, 0.0
  %v548 = vmax.f32 %v477, 0.0
  %v549 = vmax.f32 %v480, 0.0
  %v550 = vmax.f32 %v483, 0.0
  %v551 = vmax.f32 %v486, 0.0
  %vm552 = vcmask 130048
  %553 = vst.msk [vmem:[%s3] sm:$0xff] %vm552, %v488
  %554 = vst.msk [vmem:[%s3 + $0x8] sm:$0xff] %vm552, %v489
  %555 = vst.msk [vmem:[%s3 + $0x10] sm:$0xff] %vm552, %v490
  %556 = vst.msk [vmem:[%s3 + $0x18] sm:$0xff] %vm552, %v491
  %557 = vst.msk [vmem:[%s3 + $0x20] sm:$0xff] %vm552, %v492
  %558 = vst.msk [vmem:[%s3 + $0x28] sm:$0xff] %vm552, %v493
  %559 = vst.msk [vmem:[%s3 + $0x30] sm:$0xff] %vm552, %v494
  %560 = vst.msk [vmem:[%s3 + $0x38] sm:$0xff] %vm552, %v495
  %561 = vst.msk [vmem:[%s3 + $0x40] sm:$0xff] %vm552, %v496
  %562 = vst.msk [vmem:[%s3 + $0x48] sm:$0xff] %vm552, %v497
  %563 = vst.msk [vmem:[%s3 + $0x50] sm:$0xff] %vm552, %v498
  %564 = vst.msk [vmem:[%s3 + $0x58] sm:$0xff] %vm552, %v499
  %565 = vst.msk [vmem:[%s3 + $0x60] sm:$0xff] %vm552, %v500
  %566 = vst.msk [vmem:[%s3 + $0x68] sm:$0xff] %vm552, %v501
  %567 = vst.msk [vmem:[%s3 + $0x70] sm:$0xff] %vm552, %v502
  %568 = vst.msk [vmem:[%s3 + $0x78] sm:$0xff] %vm552, %v503
  %569 = vst.msk [vmem:[%s3 + $0x80] sm:$0xff] %vm552, %v504
  %570 = vst.msk [vmem:[%s3 + $0x88] sm:$0xff] %vm552, %v505
  %571 = vst.msk [vmem:[%s3 + $0x90] sm:$0xff] %vm552, %v506
  %572 = vst.msk [vmem:[%s3 + $0x98] sm:$0xff] %vm552, %v507
  %573 = vst.msk [vmem:[%s3 + $0xa0] sm:$0xff] %vm552, %v508
  %574 = vst.msk [vmem:[%s3 + $0xa8] sm:$0xff] %vm552, %v509
  %575 = vst.msk [vmem:[%s3 + $0xb0] sm:$0xff] %vm552, %v510
  %576 = vst.msk [vmem:[%s3 + $0xb8] sm:$0xff] %vm552, %v511
  %577 = vst.msk [vmem:[%s3 + $0xc0] sm:$0xff] %vm552, %v512
  %578 = vst.msk [vmem:[%s3 + $0xc8] sm:$0xff] %vm552, %v513
  %579 = vst.msk [vmem:[%s3 + $0xd0] sm:$0xff] %vm552, %v514
  %580 = vst.msk [vmem:[%s3 + $0xd8] sm:$0xff] %vm552, %v515
  %581 = vst.msk [vmem:[%s3 + $0xe0] sm:$0xff] %vm552, %v516
  %582 = vst.msk [vmem:[%s3 + $0xe8] sm:$0xff] %vm552, %v517
  %583 = vst.msk [vmem:[%s3 + $0xf0] sm:$0xff] %vm552, %v518
  %584 = vst.msk [vmem:[%s3 + $0xf8] sm:$0xff] %vm552, %v519
  %585 = vst.msk [vmem:[%s3 + $0x100] sm:$0xff] %vm552, %v520
  %586 = vst.msk [vmem:[%s3 + $0x108] sm:$0xff] %vm552, %v521
  %587 = vst.msk [vmem:[%s3 + $0x110] sm:$0xff] %vm552, %v522
  %588 = vst.msk [vmem:[%s3 + $0x118] sm:$0xff] %vm552, %v523
  %589 = vst.msk [vmem:[%s3 + $0x120] sm:$0xff] %vm552, %v524
  %590 = vst.msk [vmem:[%s3 + $0x128] sm:$0xff] %vm552, %v525
  %591 = vst.msk [vmem:[%s3 + $0x130] sm:$0xff] %vm552, %v526
  %592 = vst.msk [vmem:[%s3 + $0x138] sm:$0xff] %vm552, %v527
  %593 = vst.msk [vmem:[%s3 + $0x140] sm:$0xff] %vm552, %v528
  %594 = vst.msk [vmem:[%s3 + $0x148] sm:$0xff] %vm552, %v529
  %595 = vst.msk [vmem:[%s3 + $0x150] sm:$0xff] %vm552, %v530
  %596 = vst.msk [vmem:[%s3 + $0x158] sm:$0xff] %vm552, %v531
  %597 = vst.msk [vmem:[%s3 + $0x160] sm:$0xff] %vm552, %v532
  %598 = vst.msk [vmem:[%s3 + $0x168] sm:$0xff] %vm552, %v533
  %599 = vst.msk [vmem:[%s3 + $0x170] sm:$0xff] %vm552, %v534
  %600 = vst.msk [vmem:[%s3 + $0x178] sm:$0xff] %vm552, %v535
  %601 = vst.msk [vmem:[%s3 + $0x180] sm:$0xff] %vm552, %v536
  %602 = vst.msk [vmem:[%s3 + $0x188] sm:$0xff] %vm552, %v537
  %603 = vst.msk [vmem:[%s3 + $0x190] sm:$0xff] %vm552, %v538
  %604 = vst.msk [vmem:[%s3 + $0x198] sm:$0xff] %vm552, %v539
  %605 = vst.msk [vmem:[%s3 + $0x1a0] sm:$0xff] %vm552, %v540
  %606 = vst.msk [vmem:[%s3 + $0x1a8] sm:$0xff] %vm552, %v541
  %607 = vst.msk [vmem:[%s3 + $0x1b0] sm:$0xff] %vm552, %v542
  %608 = vst.msk [vmem:[%s3 + $0x1b8] sm:$0xff] %vm552, %v543
  %609 = vst.msk [vmem:[%s3 + $0x1c0] sm:$0xff] %vm552, %v544
  %610 = vst.msk [vmem:[%s3 + $0x1c8] sm:$0xff] %vm552, %v545
  %611 = vst.msk [vmem:[%s3 + $0x1d0] sm:$0xff] %vm552, %v546
  %612 = vst.msk [vmem:[%s3 + $0x1d8] sm:$0xff] %vm552, %v547
  %613 = vst.msk [vmem:[%s3 + $0x1e0] sm:$0xff] %vm552, %v548
  %614 = vst.msk [vmem:[%s3 + $0x1e8] sm:$0xff] %vm552, %v549
  %615 = vst.msk [vmem:[%s3 + $0x1f0] sm:$0xff] %vm552, %v550
  %616 = vst.msk [vmem:[%s3 + $0x1f8] sm:$0xff] %vm552, %v551
  // Predicated region
  $region14: #{tpu_custom_call.1} parent=0 // pred_check
    _
  $region15: #{tpu_custom_call.1} parent=0 // pred_check_branch
    %618 = sbr.rel (0) target = $region17
  $region16: #{tpu_custom_call.1} parent=0 // pred_region
    _
  $region17: #{tpu_custom_call.1} parent=0 // pred_fallthru
    _
  // Predicated region
  $region18: #{tpu_custom_call.1} parent=0 // pred_check
    _
  $region19: #{tpu_custom_call.1} parent=0 // pred_check_branch
    %620 = sbr.rel (0) target = $region21
  $region20: #{tpu_custom_call.1} parent=0 // pred_region
    _
  $region21: #{tpu_custom_call.1} parent=0 // pred_fallthru
    _

</llo_original>
